<compile_context>
chip_gen: v5e
topology: v5e:2x2
jax: 0.10.0
libtpu: 0.0.40
codegen_flags: <defaults>
</compile_context>

<pallas_src>
import functools

import jax
import jax.numpy as jnp
from jax import lax
from jax.experimental import pallas as pl
from jax.experimental.pallas import tpu as pltpu


_HALO = 8            # halo rows on each side of the activation scratch (8-aligned)
_ROWS_TARGET = 1024  # ~rows (B*L) per grid block; VMEM-friendly on v5e/v6e/v7x


# ----------------------------------------------------------------------------
# Fused kernel: conv stack + MLP head for one batch-tile
# ----------------------------------------------------------------------------
def _cnn_fused_kernel(L, C,
                      x_ref,
                      cw1, cb1, cw2, cb2, cw3, cb3, cw4, cb4,
                      fw1, fb1, fw2, fb2,
                      ocat_ref, o6_ref,
                      act_ref):
    """x_ref   : (BB*L, 1)      channels-last input, rows = b*L + l
       cwK     : (3*Cin, C)     stacked per-tap conv weights (tap0 = x[l-1])
       cbK     : (1, C)
       fw1     : (L*C, HP)      fc1 weight, rows ordered l*C + c, HP = padded hidden
       fb1     : (1, HP)        fc1 bias (zero-padded)
       fw2     : (HP, OUT), fb2: (1, OUT)
       ocat_ref: (BB*L, 4*C)    [x1 | x2 | x3 | x4]  (single lane-dense store)
       o6_ref  : (BB, OUT)
       act_ref : (BB*L + 2*HALO, C) VMEM scratch with halo rows for the +-1 taps
    """
    rows = x_ref.shape[0]            # BB * L
    bb = rows // L                   # sequences in this block
    pad = _HALO

    pos = lax.broadcasted_iota(jnp.int32, (rows, 1), 0) % L
    not_first = pos != 0             # position 0 of each sequence
    not_last = pos != (L - 1)        # position L-1 of each sequence

    # Zero the halo rows once so shifted reads at the block edges see zeros.
    zeros_halo = jnp.zeros((pad, C), jnp.float32)
    act_ref[0:pad, :] = zeros_halo
    act_ref[pad + rows:pad + rows + pad, :] = zeros_halo

    def conv_relu(x, w_ref, b_ref):
        cin = x.shape[1]
        # Stage the activation (with halo) so the l-1 / l+1 taps are plain
        # offset reads instead of concatenate-built shifted copies.
        act_ref[pad:pad + rows, 0:cin] = x
        xm1 = jnp.where(not_first, act_ref[pad - 1:pad - 1 + rows, 0:cin], 0.0)
        xp1 = jnp.where(not_last, act_ref[pad + 1:pad + 1 + rows, 0:cin], 0.0)
        xs = jnp.concatenate([xm1, x, xp1], axis=1)            # (rows, 3*cin)
        # Single fused MXU matmul per conv layer (K = 3*cin).
        y = jnp.dot(xs, w_ref[...], preferred_element_type=jnp.float32) + b_ref[...]
        return jnp.maximum(y, 0.0)

    x1 = conv_relu(x_ref[...], cw1, cb1)
    x2 = conv_relu(x1, cw2, cb2)
    x3 = conv_relu(x2, cw3, cb3)
    x4 = conv_relu(x3, cw4, cb4)

    # One lane-dense store of all four conv feature maps.
    ocat_ref[...] = jnp.concatenate([x1, x2, x3, x4], axis=1)

    # ---------------- fused MLP head ----------------
    # Flatten x4 per sequence into (bb, L*C) with column order l*C + c by
    # gathering the position-l row of every sequence (stride L sublane reads).
    act_ref[pad:pad + rows, :] = x4
    x4_flat = jnp.concatenate(
        [act_ref[pl.ds(pad + l, bb, stride=L), :] for l in range(L)], axis=1)

    h = jnp.dot(x4_flat, fw1[...], preferred_element_type=jnp.float32) + fb1[...]
    h = jnp.maximum(h, 0.0)
    o6_ref[...] = jnp.dot(h, fw2[...], preferred_element_type=jnp.float32) + fb2[...]


# ----------------------------------------------------------------------------
# One-time weight re-layout (done at init, not per call)
# ----------------------------------------------------------------------------
def prepare_params(params, *, input_dim, output_dim, num_filters, hidden_dim):
    L, C, H, OUT = input_dim, num_filters, hidden_dim, output_dim
    HP = ((H + 127) // 128) * 128      # pad hidden 100 -> 128 for lane density

    def conv_w(w):  # (C_out, C_in, 3) -> (3*C_in, C_out); row k*C_in + i = w[o, i, k]
        c_out, c_in, _ = w.shape
        return jnp.transpose(w, (2, 1, 0)).reshape(3 * c_in, c_out).astype(jnp.float32)

    prep = {}
    for i in (1, 2, 3, 4):
        prep[f"cw{i}"] = conv_w(params[f"conv{i}_w"])
        prep[f"cb{i}"] = params[f"conv{i}_b"].reshape(1, C).astype(jnp.float32)

    # fc1: PyTorch flattens (B, C, L) as c*L + l; the kernel produces l*C + c.
    w1 = params["fc1_w"].reshape(H, C, L)                 # [h, c, l]
    w1 = jnp.transpose(w1, (2, 1, 0)).reshape(L * C, H)   # row l*C + c
    prep["fw1"] = jnp.pad(w1, ((0, 0), (0, HP - H))).astype(jnp.float32)
    prep["fb1"] = jnp.pad(params["fc1_b"], (0, HP - H)).reshape(1, HP).astype(jnp.float32)
    prep["fw2"] = jnp.pad(params["fc2_w"].T, ((0, HP - H), (0, 0))).astype(jnp.float32)
    prep["fb2"] = params["fc2_b"].reshape(1, OUT).astype(jnp.float32)
    return prep


def _choose_block_b(batch, L):
    bb = max(1, _ROWS_TARGET // max(L, 1))
    if bb >= batch:
        return batch                   # single block covering everything
    return max(8, (bb // 8) * 8)       # multiple of 8 -> 8-aligned sublane blocks


# ----------------------------------------------------------------------------
# Forward pass (single Pallas kernel + thin XLA glue); jit this.
# ----------------------------------------------------------------------------
def cnn_forward(prep, x, *, input_dim, output_dim, num_filters):
    L, C, OUT = input_dim, num_filters, output_dim
    x = x.reshape(-1, L).astype(jnp.float32)       # == x.view(-1, 1, input_dim)
    B = x.shape[0]

    BB = _choose_block_b(B, L)
    B_pad = ((B + BB - 1) // BB) * BB
    if B_pad != B:
        x = jnp.pad(x, ((0, B_pad - B), (0, 0)))   # zero sequences, sliced off below
    nb = B_pad // BB
    rows = BB * L

    x0 = x.reshape(B_pad * L, 1)                   # channels-last, batch-major rows

    def full_spec(arr):
        nd = arr.ndim
        return pl.BlockSpec(arr.shape, lambda i, nd=nd: (0,) * nd)

    weight_names = ["cw1", "cb1", "cw2", "cb2", "cw3", "cb3", "cw4", "cb4",
                    "fw1", "fb1", "fw2", "fb2"]
    weights = [prep[n] for n in weight_names]

    ocat, o6 = pl.pallas_call(
        functools.partial(_cnn_fused_kernel, L, C),
        out_shape=(jax.ShapeDtypeStruct((B_pad * L, 4 * C), jnp.float32),
                   jax.ShapeDtypeStruct((B_pad, OUT), jnp.float32)),
        grid=(nb,),
        in_specs=[pl.BlockSpec((rows, 1), lambda i: (i, 0))]
                 + [full_spec(w) for w in weights],
        out_specs=(pl.BlockSpec((rows, 4 * C), lambda i: (i, 0)),
                   pl.BlockSpec((BB, OUT), lambda i: (i, 0))),
        scratch_shapes=[pltpu.VMEM((rows + 2 * _HALO, C), jnp.float32)],
        compiler_params=pltpu.CompilerParams(
            dimension_semantics=("parallel",)),
    )(x0, *weights)

    ocat = ocat[:B * L]
    o6 = o6[:B]
    # (B*L, 4C) -> (B, 4C, L), matching torch.cat([x1, x2, x3, x4_1], dim=1)
    x_cat = ocat.reshape(B, L, 4, C).transpose(0, 2, 3, 1).reshape(B, 4 * C, L)
    return o6, x_cat
    # TODO(synk): y_range sigmoid rescaling is commented out in the reference
    # module, so it is intentionally not implemented.


# ----------------------------------------------------------------------------
# Parameters (deterministic, PyTorch-like uniform fan-in init)
# ----------------------------------------------------------------------------
def init_params(key, input_dim, output_dim, num_filters, hidden_dim):
    ks = jax.random.split(key, 12)

    def u(k, shape, fan_in):
        bound = 1.0 / float(fan_in) ** 0.5
        return jax.random.uniform(k, shape, jnp.float32, -bound, bound)

    p = {}
    p["conv1_w"] = u(ks[0], (num_filters, 1, 3), 1 * 3)
    p["conv1_b"] = u(ks[1], (num_filters,), 1 * 3)
    p["conv2_w"] = u(ks[2], (num_filters, num_filters, 3), num_filters * 3)
    p["conv2_b"] = u(ks[3], (num_filters,), num_filters * 3)
    p["conv3_w"] = u(ks[4], (num_filters, num_filters, 3), num_filters * 3)
    p["conv3_b"] = u(ks[5], (num_filters,), num_filters * 3)
    p["conv4_w"] = u(ks[6], (num_filters, num_filters, 3), num_filters * 3)
    p["conv4_b"] = u(ks[7], (num_filters,), num_filters * 3)
    p["fc1_w"] = u(ks[8], (hidden_dim, input_dim * num_filters), input_dim * num_filters)
    p["fc1_b"] = u(ks[9], (hidden_dim,), input_dim * num_filters)
    p["fc2_w"] = u(ks[10], (output_dim, hidden_dim), hidden_dim)
    p["fc2_b"] = u(ks[11], (output_dim,), hidden_dim)
    return p


# ----------------------------------------------------------------------------
# Pure-JAX reference (mirrors the PyTorch forward exactly) for verification
# ----------------------------------------------------------------------------
def ref_forward(params, x, *, input_dim, output_dim, num_filters, hidden_dim):
    x = x.reshape(-1, input_dim).astype(jnp.float32)
    B, L = x.shape
    xc = x.reshape(B, 1, L)

    def conv1d(xin, w, b):
        xpad = jnp.pad(xin, ((0, 0), (0, 0), (1, 1)))
        out = b[None, :, None]
        out = out + sum(jnp.einsum("oi,bil->bol", w[:, :, k], xpad[:, :, k:k + L])
                        for k in range(3))
        return out

    x1 = jax.nn.relu(conv1d(xc, params["conv1_w"], params["conv1_b"]))
    x2 = jax.nn.relu(conv1d(x1, params["conv2_w"], params["conv2_b"]))
    x3 = jax.nn.relu(conv1d(x2, params["conv3_w"], params["conv3_b"]))
    x4 = jax.nn.relu(conv1d(x3, params["conv4_w"], params["conv4_b"]))
    flat = x4.reshape(B, num_filters * L)
    h = jax.nn.relu(flat @ params["fc1_w"].T + params["fc1_b"])
    out = h @ params["fc2_w"].T + params["fc2_b"]
    return out, jnp.concatenate([x1, x2, x3, x4], axis=1)


if __name__ == "__main__":
    INPUT_DIM, OUTPUT_DIM, NUM_FILTERS, HIDDEN_DIM = 16, 4, 10, 100
    BATCH = 2

    key = jax.random.PRNGKey(0)
    pkey, xkey = jax.random.split(key)
    params = init_params(pkey, INPUT_DIM, OUTPUT_DIM, NUM_FILTERS, HIDDEN_DIM)
    x = jax.random.normal(xkey, (BATCH, INPUT_DIM), jnp.float32)

    # One-time weight re-layout + jitted forward.
    prep = prepare_params(params, input_dim=INPUT_DIM, output_dim=OUTPUT_DIM,
                          num_filters=NUM_FILTERS, hidden_dim=HIDDEN_DIM)
    forward = jax.jit(functools.partial(cnn_forward, input_dim=INPUT_DIM,
                                        output_dim=OUTPUT_DIM,
                                        num_filters=NUM_FILTERS))

    x6, x_cat = forward(prep, x)
    jax.block_until_ready((x6, x_cat))

    r6, r_cat = ref_forward(params, x, input_dim=INPUT_DIM, output_dim=OUTPUT_DIM,
                            num_filters=NUM_FILTERS, hidden_dim=HIDDEN_DIM)

    assert x6.shape == (BATCH, OUTPUT_DIM), x6.shape
    assert x_cat.shape == (BATCH, 4 * NUM_FILTERS, INPUT_DIM), x_cat.shape
    assert jnp.allclose(x6, r6, atol=1e-4, rtol=1e-4), "fc output mismatch"
    assert jnp.allclose(x_cat, r_cat, atol=1e-4, rtol=1e-4), "conv feature mismatch"

    print("KERNEL_OK")
</pallas_src>

<mosaic_0001>
module attributes {stable_mosaic.version = 11 : i64} {
  func.func @_cnn_fused_kernel(%arg0: i32, %arg1: memref<32x1xf32, #tpu.memory_space<vmem>>, %arg2: memref<3x10xf32, #tpu.memory_space<vmem>>, %arg3: memref<1x10xf32, #tpu.memory_space<vmem>>, %arg4: memref<30x10xf32, #tpu.memory_space<vmem>>, %arg5: memref<1x10xf32, #tpu.memory_space<vmem>>, %arg6: memref<30x10xf32, #tpu.memory_space<vmem>>, %arg7: memref<1x10xf32, #tpu.memory_space<vmem>>, %arg8: memref<30x10xf32, #tpu.memory_space<vmem>>, %arg9: memref<1x10xf32, #tpu.memory_space<vmem>>, %arg10: memref<160x128xf32, #tpu.memory_space<vmem>>, %arg11: memref<1x128xf32, #tpu.memory_space<vmem>>, %arg12: memref<128x4xf32, #tpu.memory_space<vmem>>, %arg13: memref<1x4xf32, #tpu.memory_space<vmem>>, %arg14: memref<32x40xf32, #tpu.memory_space<vmem>>, %arg15: memref<2x4xf32, #tpu.memory_space<vmem>>, %arg16: memref<48x10xf32, #tpu.memory_space<vmem>>) attributes {dimension_semantics = [#tpu.dimension_semantics<parallel>], iteration_bounds = array<i64: 1>, scalar_prefetch = 0 : i64, scratch_operands = 1 : i64, tpu.core_type = #tpu.core_type<tc>, window_params = [{transform_indices = @transform_0, window_bounds = array<i64: 32, 1>}, {pipeline_mode = #tpu.pipeline_mode<synchronous>, transform_indices = @transform_1, window_bounds = array<i64: 3, 10>}, {pipeline_mode = #tpu.pipeline_mode<synchronous>, transform_indices = @transform_2, window_bounds = array<i64: 1, 10>}, {pipeline_mode = #tpu.pipeline_mode<synchronous>, transform_indices = @transform_3, window_bounds = array<i64: 30, 10>}, {pipeline_mode = #tpu.pipeline_mode<synchronous>, transform_indices = @transform_4, window_bounds = array<i64: 1, 10>}, {pipeline_mode = #tpu.pipeline_mode<synchronous>, transform_indices = @transform_5, window_bounds = array<i64: 30, 10>}, {pipeline_mode = #tpu.pipeline_mode<synchronous>, transform_indices = @transform_6, window_bounds = array<i64: 1, 10>}, {pipeline_mode = #tpu.pipeline_mode<synchronous>, transform_indices = @transform_7, window_bounds = array<i64: 30, 10>}, {pipeline_mode = #tpu.pipeline_mode<synchronous>, transform_indices = @transform_8, window_bounds = array<i64: 1, 10>}, {pipeline_mode = #tpu.pipeline_mode<synchronous>, transform_indices = @transform_9, window_bounds = array<i64: 160, 128>}, {pipeline_mode = #tpu.pipeline_mode<synchronous>, transform_indices = @transform_10, window_bounds = array<i64: 1, 128>}, {pipeline_mode = #tpu.pipeline_mode<synchronous>, transform_indices = @transform_11, window_bounds = array<i64: 128, 4>}, {pipeline_mode = #tpu.pipeline_mode<synchronous>, transform_indices = @transform_12, window_bounds = array<i64: 1, 4>}, {transform_indices = @transform_13, window_bounds = array<i64: 32, 40>}, {transform_indices = @transform_14, window_bounds = array<i64: 2, 4>}]} {
    %0 = tpu.iota {dimensions = array<i32: 0>} : vector<32x1xi32>
    %c16_i32 = arith.constant 16 : i32
    %c0_i32 = arith.constant 0 : i32
    %1 = arith.cmpi eq, %c16_i32, %c0_i32 : i32
    %c1_i32 = arith.constant 1 : i32
    %2 = arith.select %1, %c1_i32, %c16_i32 : i32
    %3 = vector.broadcast %2 : i32 to vector<32x1xi32>
    %4 = arith.remsi %0, %3 : vector<32x1xi32>
    %c0_i32_0 = arith.constant 0 : i32
    %5 = vector.broadcast %c0_i32_0 : i32 to vector<32x1xi32>
    %6 = arith.cmpi ne, %4, %5 : vector<32x1xi32>
    %c0_i32_1 = arith.constant 0 : i32
    %7 = vector.broadcast %c0_i32_1 : i32 to vector<32x1xi32>
    %8 = arith.cmpi slt, %4, %7 : vector<32x1xi32>
    %c0_i32_2 = arith.constant 0 : i32
    %9 = arith.cmpi slt, %2, %c0_i32_2 : i32
    %10 = vector.broadcast %9 : i1 to vector<32x1xi1>
    %11 = vector.broadcast %10 : vector<32x1xi1> to vector<32x1xi1>
    %12 = arith.xori %8, %11 : vector<32x1xi1>
    %13 = arith.andi %12, %6 : vector<32x1xi1>
    %14 = vector.broadcast %2 : i32 to vector<32x1xi32>
    %15 = arith.addi %4, %14 : vector<32x1xi32>
    %16 = arith.select %13, %15, %4 : vector<32x1xi1>, vector<32x1xi32>
    %c0_i32_3 = arith.constant 0 : i32
    %17 = vector.broadcast %c0_i32_3 : i32 to vector<32x1xi32>
    %18 = arith.cmpi ne, %16, %17 : vector<32x1xi32>
    %c15_i32 = arith.constant 15 : i32
    %19 = vector.broadcast %c15_i32 : i32 to vector<32x1xi32>
    %20 = arith.cmpi ne, %16, %19 : vector<32x1xi32>
    %cst = arith.constant 0.000000e+00 : f32
    %21 = vector.broadcast %cst : f32 to vector<8x10xf32>
    %c0 = arith.constant 0 : index
    %c0_4 = arith.constant 0 : index
    %22 = vector.load %arg16[%c0, %c0_4] : memref<48x10xf32, #tpu.memory_space<vmem>>, vector<8x10xf32>
    tpu.vector_store %arg16[%c0, %c0_4], %21 {strides = array<i32>} : memref<48x10xf32, #tpu.memory_space<vmem>>, vector<8x10xf32>,
    %c40 = arith.constant 40 : index
    %c0_5 = arith.constant 0 : index
    %23 = vector.load %arg16[%c40, %c0_5] : memref<48x10xf32, #tpu.memory_space<vmem>>, vector<8x10xf32>
    tpu.vector_store %arg16[%c40, %c0_5], %21 {strides = array<i32>} : memref<48x10xf32, #tpu.memory_space<vmem>>, vector<8x10xf32>,
    %c0_6 = arith.constant 0 : index
    %c0_7 = arith.constant 0 : index
    %24 = vector.load %arg1[%c0_6, %c0_7] : memref<32x1xf32, #tpu.memory_space<vmem>>, vector<32x1xf32>
    %c8 = arith.constant 8 : index
    %c0_8 = arith.constant 0 : index
    %25 = vector.load %arg16[%c8, %c0_8] : memref<48x10xf32, #tpu.memory_space<vmem>>, vector<32x1xf32>
    tpu.vector_store %arg16[%c8, %c0_8], %24 {strides = array<i32>} : memref<48x10xf32, #tpu.memory_space<vmem>>, vector<32x1xf32>,
    %c7 = arith.constant 7 : index
    %c0_9 = arith.constant 0 : index
    %26 = vector.load %arg16[%c7, %c0_9] : memref<48x10xf32, #tpu.memory_space<vmem>>, vector<32x1xf32>
    %cst_10 = arith.constant 0.000000e+00 : f32
    %27 = vector.broadcast %cst_10 : f32 to vector<32x1xf32>
    %28 = arith.select %18, %26, %27 : vector<32x1xi1>, vector<32x1xf32>
    %c9 = arith.constant 9 : index
    %c0_11 = arith.constant 0 : index
    %29 = vector.load %arg16[%c9, %c0_11] : memref<48x10xf32, #tpu.memory_space<vmem>>, vector<32x1xf32>
    %cst_12 = arith.constant 0.000000e+00 : f32
    %30 = vector.broadcast %cst_12 : f32 to vector<32x1xf32>
    %31 = arith.select %20, %29, %30 : vector<32x1xi1>, vector<32x1xf32>
    %32 = tpu.concatenate %28, %24, %31 in 1 : vector<32x1xf32>, vector<32x1xf32>, vector<32x1xf32> -> vector<32x3xf32>
    %c0_13 = arith.constant 0 : index
    %c0_14 = arith.constant 0 : index
    %33 = vector.load %arg2[%c0_13, %c0_14] : memref<3x10xf32, #tpu.memory_space<vmem>>, vector<3x10xf32>
    %cst_15 = arith.constant dense<0.000000e+00> : vector<32x10xf32>
    %34 = tpu.matmul %32, %33, %cst_15 {dimension_numbers = #tpu.dot_dimension_numbers<[1], [0], [0], [1], [0, 0, 1, 1], [], []>} : vector<32x3xf32>, vector<3x10xf32>, vector<32x10xf32> -> vector<32x10xf32>
    %c0_16 = arith.constant 0 : index
    %c0_17 = arith.constant 0 : index
    %35 = vector.load %arg3[%c0_16, %c0_17] : memref<1x10xf32, #tpu.memory_space<vmem>>, vector<1x10xf32>
    %36 = vector.broadcast %35 : vector<1x10xf32> to vector<32x10xf32>
    %37 = arith.addf %34, %36 : vector<32x10xf32>
    %cst_18 = arith.constant 0.000000e+00 : f32
    %38 = vector.broadcast %cst_18 : f32 to vector<32x10xf32>
    %39 = arith.maximumf %37, %38 : vector<32x10xf32>
    %c8_19 = arith.constant 8 : index
    %c0_20 = arith.constant 0 : index
    %40 = vector.load %arg16[%c8_19, %c0_20] : memref<48x10xf32, #tpu.memory_space<vmem>>, vector<32x10xf32>
    tpu.vector_store %arg16[%c8_19, %c0_20], %39 {strides = array<i32>} : memref<48x10xf32, #tpu.memory_space<vmem>>, vector<32x10xf32>,
    %c7_21 = arith.constant 7 : index
    %c0_22 = arith.constant 0 : index
    %41 = vector.load %arg16[%c7_21, %c0_22] : memref<48x10xf32, #tpu.memory_space<vmem>>, vector<32x10xf32>
    %cst_23 = arith.constant 0.000000e+00 : f32
    %42 = vector.shape_cast %18 : vector<32x1xi1> to vector<32x1xi1>
    %43 = vector.broadcast %42 : vector<32x1xi1> to vector<32x10xi1>
    %44 = vector.broadcast %cst_23 : f32 to vector<32x10xf32>
    %45 = arith.select %43, %41, %44 : vector<32x10xi1>, vector<32x10xf32>
    %c9_24 = arith.constant 9 : index
    %c0_25 = arith.constant 0 : index
    %46 = vector.load %arg16[%c9_24, %c0_25] : memref<48x10xf32, #tpu.memory_space<vmem>>, vector<32x10xf32>
    %cst_26 = arith.constant 0.000000e+00 : f32
    %47 = vector.shape_cast %20 : vector<32x1xi1> to vector<32x1xi1>
    %48 = vector.broadcast %47 : vector<32x1xi1> to vector<32x10xi1>
    %49 = vector.broadcast %cst_26 : f32 to vector<32x10xf32>
    %50 = arith.select %48, %46, %49 : vector<32x10xi1>, vector<32x10xf32>
    %51 = tpu.concatenate %45, %39, %50 in 1 : vector<32x10xf32>, vector<32x10xf32>, vector<32x10xf32> -> vector<32x30xf32>
    %c0_27 = arith.constant 0 : index
    %c0_28 = arith.constant 0 : index
    %52 = vector.load %arg4[%c0_27, %c0_28] : memref<30x10xf32, #tpu.memory_space<vmem>>, vector<30x10xf32>
    %cst_29 = arith.constant dense<0.000000e+00> : vector<32x10xf32>
    %53 = tpu.matmul %51, %52, %cst_29 {dimension_numbers = #tpu.dot_dimension_numbers<[1], [0], [0], [1], [0, 0, 1, 1], [], []>} : vector<32x30xf32>, vector<30x10xf32>, vector<32x10xf32> -> vector<32x10xf32>
    %c0_30 = arith.constant 0 : index
    %c0_31 = arith.constant 0 : index
    %54 = vector.load %arg5[%c0_30, %c0_31] : memref<1x10xf32, #tpu.memory_space<vmem>>, vector<1x10xf32>
    %55 = vector.broadcast %54 : vector<1x10xf32> to vector<32x10xf32>
    %56 = arith.addf %53, %55 : vector<32x10xf32>
    %cst_32 = arith.constant 0.000000e+00 : f32
    %57 = vector.broadcast %cst_32 : f32 to vector<32x10xf32>
    %58 = arith.maximumf %56, %57 : vector<32x10xf32>
    %c8_33 = arith.constant 8 : index
    %c0_34 = arith.constant 0 : index
    %59 = vector.load %arg16[%c8_33, %c0_34] : memref<48x10xf32, #tpu.memory_space<vmem>>, vector<32x10xf32>
    tpu.vector_store %arg16[%c8_33, %c0_34], %58 {strides = array<i32>} : memref<48x10xf32, #tpu.memory_space<vmem>>, vector<32x10xf32>,
    %c7_35 = arith.constant 7 : index
    %c0_36 = arith.constant 0 : index
    %60 = vector.load %arg16[%c7_35, %c0_36] : memref<48x10xf32, #tpu.memory_space<vmem>>, vector<32x10xf32>
    %cst_37 = arith.constant 0.000000e+00 : f32
    %61 = vector.shape_cast %18 : vector<32x1xi1> to vector<32x1xi1>
    %62 = vector.broadcast %61 : vector<32x1xi1> to vector<32x10xi1>
    %63 = vector.broadcast %cst_37 : f32 to vector<32x10xf32>
    %64 = arith.select %62, %60, %63 : vector<32x10xi1>, vector<32x10xf32>
    %c9_38 = arith.constant 9 : index
    %c0_39 = arith.constant 0 : index
    %65 = vector.load %arg16[%c9_38, %c0_39] : memref<48x10xf32, #tpu.memory_space<vmem>>, vector<32x10xf32>
    %cst_40 = arith.constant 0.000000e+00 : f32
    %66 = vector.shape_cast %20 : vector<32x1xi1> to vector<32x1xi1>
    %67 = vector.broadcast %66 : vector<32x1xi1> to vector<32x10xi1>
    %68 = vector.broadcast %cst_40 : f32 to vector<32x10xf32>
    %69 = arith.select %67, %65, %68 : vector<32x10xi1>, vector<32x10xf32>
    %70 = tpu.concatenate %64, %58, %69 in 1 : vector<32x10xf32>, vector<32x10xf32>, vector<32x10xf32> -> vector<32x30xf32>
    %c0_41 = arith.constant 0 : index
    %c0_42 = arith.constant 0 : index
    %71 = vector.load %arg6[%c0_41, %c0_42] : memref<30x10xf32, #tpu.memory_space<vmem>>, vector<30x10xf32>
    %cst_43 = arith.constant dense<0.000000e+00> : vector<32x10xf32>
    %72 = tpu.matmul %70, %71, %cst_43 {dimension_numbers = #tpu.dot_dimension_numbers<[1], [0], [0], [1], [0, 0, 1, 1], [], []>} : vector<32x30xf32>, vector<30x10xf32>, vector<32x10xf32> -> vector<32x10xf32>
    %c0_44 = arith.constant 0 : index
    %c0_45 = arith.constant 0 : index
    %73 = vector.load %arg7[%c0_44, %c0_45] : memref<1x10xf32, #tpu.memory_space<vmem>>, vector<1x10xf32>
    %74 = vector.broadcast %73 : vector<1x10xf32> to vector<32x10xf32>
    %75 = arith.addf %72, %74 : vector<32x10xf32>
    %cst_46 = arith.constant 0.000000e+00 : f32
    %76 = vector.broadcast %cst_46 : f32 to vector<32x10xf32>
    %77 = arith.maximumf %75, %76 : vector<32x10xf32>
    %c8_47 = arith.constant 8 : index
    %c0_48 = arith.constant 0 : index
    %78 = vector.load %arg16[%c8_47, %c0_48] : memref<48x10xf32, #tpu.memory_space<vmem>>, vector<32x10xf32>
    tpu.vector_store %arg16[%c8_47, %c0_48], %77 {strides = array<i32>} : memref<48x10xf32, #tpu.memory_space<vmem>>, vector<32x10xf32>,
    %c7_49 = arith.constant 7 : index
    %c0_50 = arith.constant 0 : index
    %79 = vector.load %arg16[%c7_49, %c0_50] : memref<48x10xf32, #tpu.memory_space<vmem>>, vector<32x10xf32>
    %cst_51 = arith.constant 0.000000e+00 : f32
    %80 = vector.shape_cast %18 : vector<32x1xi1> to vector<32x1xi1>
    %81 = vector.broadcast %80 : vector<32x1xi1> to vector<32x10xi1>
    %82 = vector.broadcast %cst_51 : f32 to vector<32x10xf32>
    %83 = arith.select %81, %79, %82 : vector<32x10xi1>, vector<32x10xf32>
    %c9_52 = arith.constant 9 : index
    %c0_53 = arith.constant 0 : index
    %84 = vector.load %arg16[%c9_52, %c0_53] : memref<48x10xf32, #tpu.memory_space<vmem>>, vector<32x10xf32>
    %cst_54 = arith.constant 0.000000e+00 : f32
    %85 = vector.shape_cast %20 : vector<32x1xi1> to vector<32x1xi1>
    %86 = vector.broadcast %85 : vector<32x1xi1> to vector<32x10xi1>
    %87 = vector.broadcast %cst_54 : f32 to vector<32x10xf32>
    %88 = arith.select %86, %84, %87 : vector<32x10xi1>, vector<32x10xf32>
    %89 = tpu.concatenate %83, %77, %88 in 1 : vector<32x10xf32>, vector<32x10xf32>, vector<32x10xf32> -> vector<32x30xf32>
    %c0_55 = arith.constant 0 : index
    %c0_56 = arith.constant 0 : index
    %90 = vector.load %arg8[%c0_55, %c0_56] : memref<30x10xf32, #tpu.memory_space<vmem>>, vector<30x10xf32>
    %cst_57 = arith.constant dense<0.000000e+00> : vector<32x10xf32>
    %91 = tpu.matmul %89, %90, %cst_57 {dimension_numbers = #tpu.dot_dimension_numbers<[1], [0], [0], [1], [0, 0, 1, 1], [], []>} : vector<32x30xf32>, vector<30x10xf32>, vector<32x10xf32> -> vector<32x10xf32>
    %c0_58 = arith.constant 0 : index
    %c0_59 = arith.constant 0 : index
    %92 = vector.load %arg9[%c0_58, %c0_59] : memref<1x10xf32, #tpu.memory_space<vmem>>, vector<1x10xf32>
    %93 = vector.broadcast %92 : vector<1x10xf32> to vector<32x10xf32>
    %94 = arith.addf %91, %93 : vector<32x10xf32>
    %cst_60 = arith.constant 0.000000e+00 : f32
    %95 = vector.broadcast %cst_60 : f32 to vector<32x10xf32>
    %96 = arith.maximumf %94, %95 : vector<32x10xf32>
    %97 = tpu.concatenate %39, %58, %77, %96 in 1 : vector<32x10xf32>, vector<32x10xf32>, vector<32x10xf32>, vector<32x10xf32> -> vector<32x40xf32>
    %c0_61 = arith.constant 0 : index
    %c0_62 = arith.constant 0 : index
    %98 = vector.load %arg14[%c0_61, %c0_62] : memref<32x40xf32, #tpu.memory_space<vmem>>, vector<32x40xf32>
    tpu.vector_store %arg14[%c0_61, %c0_62], %97 {strides = array<i32>} : memref<32x40xf32, #tpu.memory_space<vmem>>, vector<32x40xf32>,
    %c8_63 = arith.constant 8 : index
    %c0_64 = arith.constant 0 : index
    %99 = vector.load %arg16[%c8_63, %c0_64] : memref<48x10xf32, #tpu.memory_space<vmem>>, vector<32x10xf32>
    tpu.vector_store %arg16[%c8_63, %c0_64], %96 {strides = array<i32>} : memref<48x10xf32, #tpu.memory_space<vmem>>, vector<32x10xf32>,
    %c8_65 = arith.constant 8 : index
    %c0_66 = arith.constant 0 : index
    %100 = tpu.strided_load %arg16[%c8_65, %c0_66] {strides = array<i32: 16, 1>} : memref<48x10xf32, #tpu.memory_space<vmem>>, vector<2x10xf32>
    %c9_67 = arith.constant 9 : index
    %c0_68 = arith.constant 0 : index
    %101 = tpu.strided_load %arg16[%c9_67, %c0_68] {strides = array<i32: 16, 1>} : memref<48x10xf32, #tpu.memory_space<vmem>>, vector<2x10xf32>
    %c10 = arith.constant 10 : index
    %c0_69 = arith.constant 0 : index
    %102 = tpu.strided_load %arg16[%c10, %c0_69] {strides = array<i32: 16, 1>} : memref<48x10xf32, #tpu.memory_space<vmem>>, vector<2x10xf32>
    %c11 = arith.constant 11 : index
    %c0_70 = arith.constant 0 : index
    %103 = tpu.strided_load %arg16[%c11, %c0_70] {strides = array<i32: 16, 1>} : memref<48x10xf32, #tpu.memory_space<vmem>>, vector<2x10xf32>
    %c12 = arith.constant 12 : index
    %c0_71 = arith.constant 0 : index
    %104 = tpu.strided_load %arg16[%c12, %c0_71] {strides = array<i32: 16, 1>} : memref<48x10xf32, #tpu.memory_space<vmem>>, vector<2x10xf32>
    %c13 = arith.constant 13 : index
    %c0_72 = arith.constant 0 : index
    %105 = tpu.strided_load %arg16[%c13, %c0_72] {strides = array<i32: 16, 1>} : memref<48x10xf32, #tpu.memory_space<vmem>>, vector<2x10xf32>
    %c14 = arith.constant 14 : index
    %c0_73 = arith.constant 0 : index
    %106 = tpu.strided_load %arg16[%c14, %c0_73] {strides = array<i32: 16, 1>} : memref<48x10xf32, #tpu.memory_space<vmem>>, vector<2x10xf32>
    %c15 = arith.constant 15 : index
    %c0_74 = arith.constant 0 : index
    %107 = tpu.strided_load %arg16[%c15, %c0_74] {strides = array<i32: 16, 1>} : memref<48x10xf32, #tpu.memory_space<vmem>>, vector<2x10xf32>
    %c16 = arith.constant 16 : index
    %c0_75 = arith.constant 0 : index
    %108 = tpu.strided_load %arg16[%c16, %c0_75] {strides = array<i32: 16, 1>} : memref<48x10xf32, #tpu.memory_space<vmem>>, vector<2x10xf32>
    %c17 = arith.constant 17 : index
    %c0_76 = arith.constant 0 : index
    %109 = tpu.strided_load %arg16[%c17, %c0_76] {strides = array<i32: 16, 1>} : memref<48x10xf32, #tpu.memory_space<vmem>>, vector<2x10xf32>
    %c18 = arith.constant 18 : index
    %c0_77 = arith.constant 0 : index
    %110 = tpu.strided_load %arg16[%c18, %c0_77] {strides = array<i32: 16, 1>} : memref<48x10xf32, #tpu.memory_space<vmem>>, vector<2x10xf32>
    %c19 = arith.constant 19 : index
    %c0_78 = arith.constant 0 : index
    %111 = tpu.strided_load %arg16[%c19, %c0_78] {strides = array<i32: 16, 1>} : memref<48x10xf32, #tpu.memory_space<vmem>>, vector<2x10xf32>
    %c20 = arith.constant 20 : index
    %c0_79 = arith.constant 0 : index
    %112 = tpu.strided_load %arg16[%c20, %c0_79] {strides = array<i32: 16, 1>} : memref<48x10xf32, #tpu.memory_space<vmem>>, vector<2x10xf32>
    %c21 = arith.constant 21 : index
    %c0_80 = arith.constant 0 : index
    %113 = tpu.strided_load %arg16[%c21, %c0_80] {strides = array<i32: 16, 1>} : memref<48x10xf32, #tpu.memory_space<vmem>>, vector<2x10xf32>
    %c22 = arith.constant 22 : index
    %c0_81 = arith.constant 0 : index
    %114 = tpu.strided_load %arg16[%c22, %c0_81] {strides = array<i32: 16, 1>} : memref<48x10xf32, #tpu.memory_space<vmem>>, vector<2x10xf32>
    %c23 = arith.constant 23 : index
    %c0_82 = arith.constant 0 : index
    %115 = tpu.strided_load %arg16[%c23, %c0_82] {strides = array<i32: 16, 1>} : memref<48x10xf32, #tpu.memory_space<vmem>>, vector<2x10xf32>
    %116 = tpu.concatenate %100, %101, %102, %103, %104, %105, %106, %107, %108, %109, %110, %111, %112, %113, %114, %115 in 1 : vector<2x10xf32>, vector<2x10xf32>, vector<2x10xf32>, vector<2x10xf32>, vector<2x10xf32>, vector<2x10xf32>, vector<2x10xf32>, vector<2x10xf32>, vector<2x10xf32>, vector<2x10xf32>, vector<2x10xf32>, vector<2x10xf32>, vector<2x10xf32>, vector<2x10xf32>, vector<2x10xf32>, vector<2x10xf32> -> vector<2x160xf32>
    %c0_83 = arith.constant 0 : index
    %c0_84 = arith.constant 0 : index
    %117 = vector.load %arg10[%c0_83, %c0_84] : memref<160x128xf32, #tpu.memory_space<vmem>>, vector<160x128xf32>
    %cst_85 = arith.constant dense<0.000000e+00> : vector<2x128xf32>
    %118 = tpu.matmul %116, %117, %cst_85 {dimension_numbers = #tpu.dot_dimension_numbers<[1], [0], [0], [1], [0, 0, 1, 1], [], []>} : vector<2x160xf32>, vector<160x128xf32>, vector<2x128xf32> -> vector<2x128xf32>
    %c0_86 = arith.constant 0 : index
    %c0_87 = arith.constant 0 : index
    %119 = vector.load %arg11[%c0_86, %c0_87] : memref<1x128xf32, #tpu.memory_space<vmem>>, vector<1x128xf32>
    %120 = vector.broadcast %119 : vector<1x128xf32> to vector<2x128xf32>
    %121 = arith.addf %118, %120 : vector<2x128xf32>
    %cst_88 = arith.constant 0.000000e+00 : f32
    %122 = vector.broadcast %cst_88 : f32 to vector<2x128xf32>
    %123 = arith.maximumf %121, %122 : vector<2x128xf32>
    %c0_89 = arith.constant 0 : index
    %c0_90 = arith.constant 0 : index
    %124 = vector.load %arg12[%c0_89, %c0_90] : memref<128x4xf32, #tpu.memory_space<vmem>>, vector<128x4xf32>
    %cst_91 = arith.constant dense<0.000000e+00> : vector<2x4xf32>
    %125 = tpu.matmul %123, %124, %cst_91 {dimension_numbers = #tpu.dot_dimension_numbers<[1], [0], [0], [1], [0, 0, 1, 1], [], []>} : vector<2x128xf32>, vector<128x4xf32>, vector<2x4xf32> -> vector<2x4xf32>
    %c0_92 = arith.constant 0 : index
    %c0_93 = arith.constant 0 : index
    %126 = vector.load %arg13[%c0_92, %c0_93] : memref<1x4xf32, #tpu.memory_space<vmem>>, vector<1x4xf32>
    %127 = vector.broadcast %126 : vector<1x4xf32> to vector<2x4xf32>
    %128 = arith.addf %125, %127 : vector<2x4xf32>
    %c0_94 = arith.constant 0 : index
    %c0_95 = arith.constant 0 : index
    %129 = vector.load %arg15[%c0_94, %c0_95] : memref<2x4xf32, #tpu.memory_space<vmem>>, vector<2x4xf32>
    tpu.vector_store %arg15[%c0_94, %c0_95], %128 {strides = array<i32>} : memref<2x4xf32, #tpu.memory_space<vmem>>, vector<2x4xf32>,
    return
  }
  func.func @transform_0(%arg0: i32) -> (i32, i32) {
    %c0_i32 = arith.constant 0 : i32
    %c0_i32_0 = arith.constant 0 : i32
    return %arg0, %c0_i32 : i32, i32
  }
  func.func @transform_1(%arg0: i32) -> (i32, i32) {
    %c0_i32 = arith.constant 0 : i32
    %c0_i32_0 = arith.constant 0 : i32
    %c0_i32_1 = arith.constant 0 : i32
    return %c0_i32, %c0_i32_0 : i32, i32
  }
  func.func @transform_2(%arg0: i32) -> (i32, i32) {
    %c0_i32 = arith.constant 0 : i32
    %c0_i32_0 = arith.constant 0 : i32
    %c0_i32_1 = arith.constant 0 : i32
    return %c0_i32, %c0_i32_0 : i32, i32
  }
  func.func @transform_3(%arg0: i32) -> (i32, i32) {
    %c0_i32 = arith.constant 0 : i32
    %c0_i32_0 = arith.constant 0 : i32
    %c0_i32_1 = arith.constant 0 : i32
    return %c0_i32, %c0_i32_0 : i32, i32
  }
  func.func @transform_4(%arg0: i32) -> (i32, i32) {
    %c0_i32 = arith.constant 0 : i32
    %c0_i32_0 = arith.constant 0 : i32
    %c0_i32_1 = arith.constant 0 : i32
    return %c0_i32, %c0_i32_0 : i32, i32
  }
  func.func @transform_5(%arg0: i32) -> (i32, i32) {
    %c0_i32 = arith.constant 0 : i32
    %c0_i32_0 = arith.constant 0 : i32
    %c0_i32_1 = arith.constant 0 : i32
    return %c0_i32, %c0_i32_0 : i32, i32
  }
  func.func @transform_6(%arg0: i32) -> (i32, i32) {
    %c0_i32 = arith.constant 0 : i32
    %c0_i32_0 = arith.constant 0 : i32
    %c0_i32_1 = arith.constant 0 : i32
    return %c0_i32, %c0_i32_0 : i32, i32
  }
  func.func @transform_7(%arg0: i32) -> (i32, i32) {
    %c0_i32 = arith.constant 0 : i32
    %c0_i32_0 = arith.constant 0 : i32
    %c0_i32_1 = arith.constant 0 : i32
    return %c0_i32, %c0_i32_0 : i32, i32
  }
  func.func @transform_8(%arg0: i32) -> (i32, i32) {
    %c0_i32 = arith.constant 0 : i32
    %c0_i32_0 = arith.constant 0 : i32
    %c0_i32_1 = arith.constant 0 : i32
    return %c0_i32, %c0_i32_0 : i32, i32
  }
  func.func @transform_9(%arg0: i32) -> (i32, i32) {
    %c0_i32 = arith.constant 0 : i32
    %c0_i32_0 = arith.constant 0 : i32
    %c0_i32_1 = arith.constant 0 : i32
    return %c0_i32, %c0_i32_0 : i32, i32
  }
  func.func @transform_10(%arg0: i32) -> (i32, i32) {
    %c0_i32 = arith.constant 0 : i32
    %c0_i32_0 = arith.constant 0 : i32
    %c0_i32_1 = arith.constant 0 : i32
    return %c0_i32, %c0_i32_0 : i32, i32
  }
  func.func @transform_11(%arg0: i32) -> (i32, i32) {
    %c0_i32 = arith.constant 0 : i32
    %c0_i32_0 = arith.constant 0 : i32
    %c0_i32_1 = arith.constant 0 : i32
    return %c0_i32, %c0_i32_0 : i32, i32
  }
  func.func @transform_12(%arg0: i32) -> (i32, i32) {
    %c0_i32 = arith.constant 0 : i32
    %c0_i32_0 = arith.constant 0 : i32
    %c0_i32_1 = arith.constant 0 : i32
    return %c0_i32, %c0_i32_0 : i32, i32
  }
  func.func @transform_13(%arg0: i32) -> (i32, i32) {
    %c0_i32 = arith.constant 0 : i32
    %c0_i32_0 = arith.constant 0 : i32
    return %arg0, %c0_i32 : i32, i32
  }
  func.func @transform_14(%arg0: i32) -> (i32, i32) {
    %c0_i32 = arith.constant 0 : i32
    %c0_i32_0 = arith.constant 0 : i32
    return %arg0, %c0_i32 : i32, i32
  }
}

</mosaic_0001>

<llo_original>
// kernel: cnn_forward.1
$region0: #{cnn_forward.1}
  #allocation0 [shape = 'u32[]', space=smem, size = 0x4, offset = 0x4, fixed_abs, tag = 'smem constant byte address 0x4 - core index']
  #allocation1 [shape = 'u32[72,128]{1,0:T(1,128)}', space=vmem, size = 0x9000, scoped, tag = 'internal scratch']
  #allocation2 [shape = 'f32[48,10]{1,0:T(8,128)}', space=vmem, size = 0x6000, scoped, tag = 'scratch operand']
  %s0 = inlined_call_operand.vmem [shape: f32[32,1], index: 0, kind: input, shape index: {}]
  %s1 = inlined_call_operand.vmem [shape: f32[3,10], index: 1, kind: input, shape index: {}]
  %s2 = inlined_call_operand.vmem [shape: f32[1,10], index: 2, kind: input, shape index: {}]
  %s3 = inlined_call_operand.vmem [shape: f32[30,10], index: 3, kind: input, shape index: {}]
  %s4 = inlined_call_operand.vmem [shape: f32[1,10], index: 4, kind: input, shape index: {}]
  %s5 = inlined_call_operand.vmem [shape: f32[30,10], index: 5, kind: input, shape index: {}]
  %s6 = inlined_call_operand.vmem [shape: f32[1,10], index: 6, kind: input, shape index: {}]
  %s7 = inlined_call_operand.vmem [shape: f32[30,10], index: 7, kind: input, shape index: {}]
  %s8 = inlined_call_operand.vmem [shape: f32[1,10], index: 8, kind: input, shape index: {}]
  %s9 = inlined_call_operand.vmem [shape: f32[160,128], index: 9, kind: input, shape index: {}]
  %s10 = inlined_call_operand.vmem [shape: f32[1,128], index: 10, kind: input, shape index: {}]
  %s11 = inlined_call_operand.vmem [shape: f32[128,4], index: 11, kind: input, shape index: {}]
  %s12 = inlined_call_operand.vmem [shape: f32[1,4], index: 12, kind: input, shape index: {}]
  %s13 = inlined_call_operand.vmem [shape: f32[32,40], index: 13, kind: output, shape index: {0}]
  %s14 = inlined_call_operand.hbm [shape: f32[2,4], index: 14, kind: output, shape index: {1}]
  %15 = xla_tuple %s13, %s14
  %s16 = sld [smem:[#allocation0]]
  $region70: #{cnn_forward.1} parent=0
    _
  %s18 = ssub.s32 1, %s16
  %s19 = scalar_select 0, %s18, %s16
  $region1: #{cnn_forward.1} parent=0
    #allocation3 [shape = 'u8[1024]{0}', space=vmem, size = 0x400, scoped, tag = 'output window, operand 1, single buffered']
    #allocation4 [shape = 's32[1]{0}', space=sflag, size = 0x4, scoped, tag = 'scoped memory for cnn_forward.1']
    %20 = vsyncpa [#allocation4], 0
    // Predicated region
    $region2: #{cnn_forward.1} parent=1 // pred_check
      _
    $region3: #{cnn_forward.1} parent=1 // pred_check_branch
      %22 = sbr.rel (0) target = $region5
    $region4: #{cnn_forward.1} parent=1 // pred_region
      _
    $region5: #{cnn_forward.1} parent=1 // pred_fallthru
      _
    // Predicated region
    $region6: #{cnn_forward.1} parent=1 // pred_check
      _
    $region7: #{cnn_forward.1} parent=1 // pred_check_branch
      %24 = sbr.rel (0) target = $region9
    $region8: #{cnn_forward.1} parent=1 // pred_region
      _
    $region9: #{cnn_forward.1} parent=1 // pred_fallthru
      _
    // Predicated region
    $region10: #{cnn_forward.1} parent=1 // pred_check
      _
    $region11: #{cnn_forward.1} parent=1 // pred_check_branch
      %26 = sbr.rel (0) target = $region13
    $region12: #{cnn_forward.1} parent=1 // pred_region
      _
    $region13: #{cnn_forward.1} parent=1 // pred_fallthru
      _
    // Predicated region
    $region14: #{cnn_forward.1} parent=1 // pred_check
      _
    $region15: #{cnn_forward.1} parent=1 // pred_check_branch
      %28 = sbr.rel (0) target = $region17
    $region16: #{cnn_forward.1} parent=1 // pred_region
      _
    $region17: #{cnn_forward.1} parent=1 // pred_fallthru
      _
    // Predicated region
    $region18: #{cnn_forward.1} parent=1 // pred_check
      _
    $region19: #{cnn_forward.1} parent=1 // pred_check_branch
      %30 = sbr.rel (0) target = $region21
    $region20: #{cnn_forward.1} parent=1 // pred_region
      _
    $region21: #{cnn_forward.1} parent=1 // pred_fallthru
      _
    // Predicated region
    $region22: #{cnn_forward.1} parent=1 // pred_check
      _
    $region23: #{cnn_forward.1} parent=1 // pred_check_branch
      %32 = sbr.rel (0) target = $region25
    $region24: #{cnn_forward.1} parent=1 // pred_region
      _
    $region25: #{cnn_forward.1} parent=1 // pred_fallthru
      _
    // Predicated region
    $region26: #{cnn_forward.1} parent=1 // pred_check
      _
    $region27: #{cnn_forward.1} parent=1 // pred_check_branch
      %34 = sbr.rel (0) target = $region29
    $region28: #{cnn_forward.1} parent=1 // pred_region
      _
    $region29: #{cnn_forward.1} parent=1 // pred_fallthru
      _
    // Predicated region
    $region30: #{cnn_forward.1} parent=1 // pred_check
      _
    $region31: #{cnn_forward.1} parent=1 // pred_check_branch
      %36 = sbr.rel (0) target = $region33
    $region32: #{cnn_forward.1} parent=1 // pred_region
      _
    $region33: #{cnn_forward.1} parent=1 // pred_fallthru
      _
    // Predicated region
    $region34: #{cnn_forward.1} parent=1 // pred_check
      _
    $region35: #{cnn_forward.1} parent=1 // pred_check_branch
      %38 = sbr.rel (0) target = $region37
    $region36: #{cnn_forward.1} parent=1 // pred_region
      _
    $region37: #{cnn_forward.1} parent=1 // pred_fallthru
      _
    // Predicated region
    $region38: #{cnn_forward.1} parent=1 // pred_check
      _
    $region39: #{cnn_forward.1} parent=1 // pred_check_branch
      %40 = sbr.rel (0) target = $region41
    $region40: #{cnn_forward.1} parent=1 // pred_region
      _
    $region41: #{cnn_forward.1} parent=1 // pred_fallthru
      _
    // Predicated region
    $region42: #{cnn_forward.1} parent=1 // pred_check
      _
    $region43: #{cnn_forward.1} parent=1 // pred_check_branch
      %42 = sbr.rel (0) target = $region45
    $region44: #{cnn_forward.1} parent=1 // pred_region
      _
    $region45: #{cnn_forward.1} parent=1 // pred_fallthru
      _
    // Predicated region
    $region46: #{cnn_forward.1} parent=1 // pred_check
      _
    $region47: #{cnn_forward.1} parent=1 // pred_check_branch
      %44 = sbr.rel (0) target = $region49
    $region48: #{cnn_forward.1} parent=1 // pred_region
      _
    $region49: #{cnn_forward.1} parent=1 // pred_fallthru
      _
    // Predicated region
    $region50: #{cnn_forward.1} parent=1 // pred_check
      _
    $region51: #{cnn_forward.1} parent=1 // pred_check_branch
      %46 = sbr.rel (0) target = $region53
    $region52: #{cnn_forward.1} parent=1 // pred_region
      _
    $region53: #{cnn_forward.1} parent=1 // pred_fallthru
      _
    %v47 = vlaneseq
    %v48 = vshrl.u32 %v47, 7
    %v49 = vadd.s32 %v48, 8
    %v50 = vadd.s32 %v48, 16
    %v51 = vadd.s32 %v48, 24
    %vm52 = vcmp.lt.s32.totalorder %v48, 0
    %v53 = vsub.s32 0, %v48
    %v54 = vsel %vm52, %v53, %v48
    %v55 = vshrl.u32 %v54, 4
    %v56 = vand.u32 %v54, 15
    %v57 = vsub.s32 0, %v56
    %v58 = vsel %vm52, %v57, %v56
    %vm59 = vcmp.lt.s32.totalorder %v49, 0
    %v60 = vsub.s32 0, %v49
    %v61 = vsel %vm59, %v60, %v49
    %v62 = vshrl.u32 %v61, 4
    %v63 = vand.u32 %v61, 15
    %v64 = vsub.s32 0, %v63
    %v65 = vsel %vm59, %v64, %v63
    %vm66 = vcmp.lt.s32.totalorder %v50, 0
    %v67 = vsub.s32 0, %v50
    %v68 = vsel %vm66, %v67, %v50
    %v69 = vshrl.u32 %v68, 4
    %v70 = vand.u32 %v68, 15
    %v71 = vsub.s32 0, %v70
    %v72 = vsel %vm66, %v71, %v70
    %vm73 = vcmp.lt.s32.totalorder %v51, 0
    %v74 = vsub.s32 0, %v51
    %v75 = vsel %vm73, %v74, %v51
    %v76 = vshrl.u32 %v75, 4
    %v77 = vand.u32 %v75, 15
    %v78 = vsub.s32 0, %v77
    %v79 = vsel %vm73, %v78, %v77
    %vm80 = vcmp.ne.s32.totalorder %v58, 0
    %vm81 = vcmp.ne.s32.totalorder %v65, 0
    %vm82 = vcmp.ne.s32.totalorder %v72, 0
    %vm83 = vcmp.ne.s32.totalorder %v79, 0
    %vm84 = vcmp.lt.s32.totalorder %v58, 0
    %vm85 = vcmp.lt.s32.totalorder %v65, 0
    %vm86 = vcmp.lt.s32.totalorder %v72, 0
    %vm87 = vcmp.lt.s32.totalorder %v79, 0
    %vm88 = vmand %vm84, %vm80
    %vm89 = vmand %vm85, %vm81
    %vm90 = vmand %vm86, %vm82
    %vm91 = vmand %vm87, %vm83
    %v92 = vadd.s32 %v58, 16
    %v93 = vadd.s32 %v65, 16
    %v94 = vadd.s32 %v72, 16
    %v95 = vadd.s32 %v79, 16
    %v96 = vsel %vm88, %v92, %v58
    %v97 = vsel %vm89, %v93, %v65
    %v98 = vsel %vm90, %v94, %v72
    %v99 = vsel %vm91, %v95, %v79
    %vm100 = vcmp.ne.s32.totalorder %v96, 0
    %vm101 = vcmp.ne.s32.totalorder %v97, 0
    %vm102 = vcmp.ne.s32.totalorder %v98, 0
    %vm103 = vcmp.ne.s32.totalorder %v99, 0
    %vm104 = vcmp.ne.s32.totalorder %v96, 15
    %vm105 = vcmp.ne.s32.totalorder %v97, 15
    %vm106 = vcmp.ne.s32.totalorder %v98, 15
    %vm107 = vcmp.ne.s32.totalorder %v99, 15
    %vm108 = vcmask 80896
    %109 = vst.msk [vmem:[#allocation2] sm:$0xff] %vm108, 0.0
    %110 = vst.msk [vmem:[#allocation2 + $0x28] sm:$0xff] %vm108, 0.0
    %v111 = vld [vmem:[%s0] sm:$0xff]
    %v112 = vld [vmem:[%s0 + $0x8] sm:$0xff]
    %v113 = vld [vmem:[%s0 + $0x10] sm:$0xff]
    %v114 = vld [vmem:[%s0 + $0x18] sm:$0xff]
    %vm115 = vcmask 7168
    %116 = vst.msk [vmem:[#allocation2 + $0x8] sm:$0xff] %vm115, %v111
    %117 = vst.msk [vmem:[#allocation2 + $0x10] sm:$0xff] %vm115, %v112
    %118 = vst.msk [vmem:[#allocation2 + $0x18] sm:$0xff] %vm115, %v113
    %119 = vst.msk [vmem:[#allocation2 + $0x20] sm:$0xff] %vm115, %v114
    %v120 = vld [vmem:[#allocation2 + $0x7] sm:$0xff]
    %v121 = vld [vmem:[#allocation2 + $0xf] sm:$0xff]
    %v122 = vld [vmem:[#allocation2 + $0x17] sm:$0xff]
    %v123 = vld [vmem:[#allocation2 + $0x1f] sm:$0xff]
    %v124 = vsel %vm100, %v120, 0.0
    %v125 = vsel %vm101, %v121, 0.0
    %v126 = vsel %vm102, %v122, 0.0
    %v127 = vsel %vm103, %v123, 0.0
    %v128 = vld [vmem:[#allocation2 + $0x9] sm:$0xff]
    %v129 = vld [vmem:[#allocation2 + $0x11] sm:$0xff]
    %v130 = vld [vmem:[#allocation2 + $0x19] sm:$0xff]
    %v131 = vld [vmem:[#allocation2 + $0x21] sm:$0xff]
    %v132 = vsel %vm104, %v128, 0.0
    %v133 = vsel %vm105, %v129, 0.0
    %v134 = vsel %vm106, %v130, 0.0
    %v135 = vsel %vm107, %v131, 0.0
    %140 = vrot.lane.b32.xlu0 %v111, 1
    %v141 = vpop.permute.xlu0 %140
    %142 = vrot.lane.b32.xlu0 %v112, 1
    %v143 = vpop.permute.xlu0 %142
    %144 = vrot.lane.b32.xlu0 %v113, 1
    %v145 = vpop.permute.xlu0 %144
    %146 = vrot.lane.b32.xlu0 %v114, 1
    %v147 = vpop.permute.xlu0 %146
    %156 = vrot.lane.b32.xlu0 %v132, 2
    %v157 = vpop.permute.xlu0 %156
    %158 = vrot.lane.b32.xlu0 %v133, 2
    %v159 = vpop.permute.xlu0 %158
    %160 = vrot.lane.b32.xlu0 %v134, 2
    %v161 = vpop.permute.xlu0 %160
    %162 = vrot.lane.b32.xlu0 %v135, 2
    %v163 = vpop.permute.xlu0 %162
    %v168 = vsel %vm115, %v124, %v141
    %v169 = vsel %vm115, %v125, %v143
    %v170 = vsel %vm115, %v126, %v145
    %v171 = vsel %vm115, %v127, %v147
    %vm172 = vcmask 15360
    %v173 = vsel %vm172, %v168, %v157
    %v174 = vsel %vm172, %v169, %v159
    %v175 = vsel %vm172, %v170, %v161
    %v176 = vsel %vm172, %v171, %v163
    %v177 = vld [vmem:[%s1] sm:$0x7]
    %v178 = vld [vmem:[%s2] sm:$0x1]
    %v180 = vperm.slane %v178, 0
    %vm182 = vcmask 23552
    %v184 = vsel %vm182, %v173, 0
    %v187 = vsel %vm182, %v174, 0
    %v190 = vsel %vm182, %v175, 0
    %v193 = vsel %vm182, %v176, 0
    %vm195 = vcmask 1042432
    %v197 = vsel %vm195, %v177, 0
    %199 = vmatpush.msra.mxu0 0.0
    %200 = vmatpush.msra.mxu0 0.0
    %201 = vmatpush.msra.mxu0 0.0
    %202 = vmatpush.msra.mxu0 0.0
    %203 = vmatpush.msra.mxu0 0.0
    %204 = vmatpush.msra.mxu0 0.0
    %205 = vmatpush.msra.mxu0 0.0
    %206 = vmatpush.msra.mxu0 0.0
    %207 = vmatpush.msra.mxu0 0.0
    %208 = vmatpush.msra.mxu0 0.0
    %209 = vmatpush.msra.mxu0 0.0
    %210 = vmatpush.msra.mxu0 0.0
    %211 = vmatpush.msra.mxu0 0.0
    %212 = vmatpush.msra.mxu0 0.0
    %213 = vmatpush.msra.mxu0 0.0
    %214 = vmatpush.msra.mxu0 %v197
    %215 = vmatmul.f32.gmra.mxu0 %v184
    %v216 = vpop.f32.mrf.mxu0
    %v217 = vadd.f32 %v180, %v216
    %218 = vmatmul.f32.gmra.mxu0 %v187
    %v219 = vpop.f32.mrf.mxu0
    %v220 = vadd.f32 %v180, %v219
    %221 = vmatmul.f32.gmra.mxu0 %v190
    %v222 = vpop.f32.mrf.mxu0
    %v223 = vadd.f32 %v180, %v222
    %224 = vmatmul.f32.gmra.mxu0 %v193
    %v225 = vpop.f32.mrf.mxu0
    %v226 = vadd.f32 %v180, %v225
    %227 = vdwg.mxu0
    %v228 = vmax.f32 %v217, 0.0
    %v229 = vmax.f32 %v220, 0.0
    %v230 = vmax.f32 %v223, 0.0
    %v231 = vmax.f32 %v226, 0.0
    %232 = vst.msk [vmem:[#allocation2 + $0x8] sm:$0xff] %vm108, %v228
    %233 = vst.msk [vmem:[#allocation2 + $0x10] sm:$0xff] %vm108, %v229
    %234 = vst.msk [vmem:[#allocation2 + $0x18] sm:$0xff] %vm108, %v230
    %235 = vst.msk [vmem:[#allocation2 + $0x20] sm:$0xff] %vm108, %v231
    %v236 = vld [vmem:[#allocation2 + $0x7] sm:$0xff]
    %v237 = vld [vmem:[#allocation2 + $0xf] sm:$0xff]
    %v238 = vld [vmem:[#allocation2 + $0x17] sm:$0xff]
    %v239 = vld [vmem:[#allocation2 + $0x1f] sm:$0xff]
    %v240 = vsel %vm100, 1, 0
    %v241 = vsel %vm101, 1, 0
    %v242 = vsel %vm102, 1, 0
    %v243 = vsel %vm103, 1, 0
    %vm244 = vcmp.eq.s32.totalorder %v240, 1
    %vm245 = vcmp.eq.s32.totalorder %v241, 1
    %vm246 = vcmp.eq.s32.totalorder %v242, 1
    %vm247 = vcmp.eq.s32.totalorder %v243, 1
    %v248 = vsel %vm244, %v236, 0.0
    %v249 = vsel %vm245, %v237, 0.0
    %v250 = vsel %vm246, %v238, 0.0
    %v251 = vsel %vm247, %v239, 0.0
    %v252 = vld [vmem:[#allocation2 + $0x9] sm:$0xff]
    %v253 = vld [vmem:[#allocation2 + $0x11] sm:$0xff]
    %v254 = vld [vmem:[#allocation2 + $0x19] sm:$0xff]
    %v255 = vld [vmem:[#allocation2 + $0x21] sm:$0xff]
    %v256 = vsel %vm104, 1, 0
    %v257 = vsel %vm105, 1, 0
    %v258 = vsel %vm106, 1, 0
    %v259 = vsel %vm107, 1, 0
    %vm260 = vcmp.eq.s32.totalorder %v256, 1
    %vm261 = vcmp.eq.s32.totalorder %v257, 1
    %vm262 = vcmp.eq.s32.totalorder %v258, 1
    %vm263 = vcmp.eq.s32.totalorder %v259, 1
    %v264 = vsel %vm260, %v252, 0.0
    %v265 = vsel %vm261, %v253, 0.0
    %v266 = vsel %vm262, %v254, 0.0
    %v267 = vsel %vm263, %v255, 0.0
    %272 = vrot.lane.b32.xlu0 %v228, 10
    %v273 = vpop.permute.xlu0 %272
    %274 = vrot.lane.b32.xlu0 %v229, 10
    %v275 = vpop.permute.xlu0 %274
    %276 = vrot.lane.b32.xlu0 %v230, 10
    %v277 = vpop.permute.xlu0 %276
    %278 = vrot.lane.b32.xlu0 %v231, 10
    %v279 = vpop.permute.xlu0 %278
    %288 = vrot.lane.b32.xlu0 %v264, 20
    %v289 = vpop.permute.xlu0 %288
    %290 = vrot.lane.b32.xlu0 %v265, 20
    %v291 = vpop.permute.xlu0 %290
    %292 = vrot.lane.b32.xlu0 %v266, 20
    %v293 = vpop.permute.xlu0 %292
    %294 = vrot.lane.b32.xlu0 %v267, 20
    %v295 = vpop.permute.xlu0 %294
    %v300 = vsel %vm108, %v248, %v273
    %v301 = vsel %vm108, %v249, %v275
    %v302 = vsel %vm108, %v250, %v277
    %v303 = vsel %vm108, %v251, %v279
    %vm304 = vcmask 162816
    %v305 = vsel %vm304, %v300, %v289
    %v306 = vsel %vm304, %v301, %v291
    %v307 = vsel %vm304, %v302, %v293
    %v308 = vsel %vm304, %v303, %v295
    %v309 = vld [vmem:[%s3] sm:$0xff]
    %v310 = vld [vmem:[%s3 + $0x8] sm:$0xff]
    %v311 = vld [vmem:[%s3 + $0x10] sm:$0xff]
    %v312 = vld [vmem:[%s3 + $0x18] sm:$0x3f]
    %v313 = vld [vmem:[%s4] sm:$0x1]
    %v315 = vperm.slane %v313, 0
    %vm317 = vcmask 244736
    %v319 = vsel %vm317, %v305, 0
    %v322 = vsel %vm317, %v306, 0
    %v325 = vsel %vm317, %v307, 0
    %v328 = vsel %vm317, %v308, 0
    %vm330 = vcmask 1045504
    %v332 = vsel %vm330, %v312, 0
    %334 = vmatpush.msra.mxu0 0.0
    %335 = vmatpush.msra.mxu0 0.0
    %336 = vmatpush.msra.mxu0 0.0
    %337 = vmatpush.msra.mxu0 0.0
    %338 = vmatpush.msra.mxu0 0.0
    %339 = vmatpush.msra.mxu0 0.0
    %340 = vmatpush.msra.mxu0 0.0
    %341 = vmatpush.msra.mxu0 0.0
    %342 = vmatpush.msra.mxu0 0.0
    %343 = vmatpush.msra.mxu0 0.0
    %344 = vmatpush.msra.mxu0 0.0
    %345 = vmatpush.msra.mxu0 0.0
    %346 = vmatpush.msra.mxu0 %v332
    %347 = vmatpush.msra.mxu0 %v311
    %348 = vmatpush.msra.mxu0 %v310
    %349 = vmatpush.msra.mxu0 %v309
    %350 = vmatmul.f32.gmra.mxu0 %v319
    %v351 = vpop.f32.mrf.mxu0
    %v352 = vadd.f32 %v315, %v351
    %353 = vmatmul.f32.gmra.mxu0 %v322
    %v354 = vpop.f32.mrf.mxu0
    %v355 = vadd.f32 %v315, %v354
    %356 = vmatmul.f32.gmra.mxu0 %v325
    %v357 = vpop.f32.mrf.mxu0
    %v358 = vadd.f32 %v315, %v357
    %359 = vmatmul.f32.gmra.mxu0 %v328
    %v360 = vpop.f32.mrf.mxu0
    %v361 = vadd.f32 %v315, %v360
    %362 = vdwg.mxu0
    %v363 = vmax.f32 %v352, 0.0
    %v364 = vmax.f32 %v355, 0.0
    %v365 = vmax.f32 %v358, 0.0
    %v366 = vmax.f32 %v361, 0.0
    %367 = vst.msk [vmem:[#allocation2 + $0x8] sm:$0xff] %vm108, %v363
    %368 = vst.msk [vmem:[#allocation2 + $0x10] sm:$0xff] %vm108, %v364
    %369 = vst.msk [vmem:[#allocation2 + $0x18] sm:$0xff] %vm108, %v365
    %370 = vst.msk [vmem:[#allocation2 + $0x20] sm:$0xff] %vm108, %v366
    %v371 = vld [vmem:[#allocation2 + $0x7] sm:$0xff]
    %v372 = vld [vmem:[#allocation2 + $0xf] sm:$0xff]
    %v373 = vld [vmem:[#allocation2 + $0x17] sm:$0xff]
    %v374 = vld [vmem:[#allocation2 + $0x1f] sm:$0xff]
    %v375 = vsel %vm244, %v371, 0.0
    %v376 = vsel %vm245, %v372, 0.0
    %v377 = vsel %vm246, %v373, 0.0
    %v378 = vsel %vm247, %v374, 0.0
    %v379 = vld [vmem:[#allocation2 + $0x9] sm:$0xff]
    %v380 = vld [vmem:[#allocation2 + $0x11] sm:$0xff]
    %v381 = vld [vmem:[#allocation2 + $0x19] sm:$0xff]
    %v382 = vld [vmem:[#allocation2 + $0x21] sm:$0xff]
    %v383 = vsel %vm260, %v379, 0.0
    %v384 = vsel %vm261, %v380, 0.0
    %v385 = vsel %vm262, %v381, 0.0
    %v386 = vsel %vm263, %v382, 0.0
    %391 = vrot.lane.b32.xlu0 %v363, 10
    %v392 = vpop.permute.xlu0 %391
    %393 = vrot.lane.b32.xlu0 %v364, 10
    %v394 = vpop.permute.xlu0 %393
    %395 = vrot.lane.b32.xlu0 %v365, 10
    %v396 = vpop.permute.xlu0 %395
    %397 = vrot.lane.b32.xlu0 %v366, 10
    %v398 = vpop.permute.xlu0 %397
    %407 = vrot.lane.b32.xlu0 %v383, 20
    %v408 = vpop.permute.xlu0 %407
    %409 = vrot.lane.b32.xlu0 %v384, 20
    %v410 = vpop.permute.xlu0 %409
    %411 = vrot.lane.b32.xlu0 %v385, 20
    %v412 = vpop.permute.xlu0 %411
    %413 = vrot.lane.b32.xlu0 %v386, 20
    %v414 = vpop.permute.xlu0 %413
    %v419 = vsel %vm108, %v375, %v392
    %v420 = vsel %vm108, %v376, %v394
    %v421 = vsel %vm108, %v377, %v396
    %v422 = vsel %vm108, %v378, %v398
    %v423 = vsel %vm304, %v419, %v408
    %v424 = vsel %vm304, %v420, %v410
    %v425 = vsel %vm304, %v421, %v412
    %v426 = vsel %vm304, %v422, %v414
    %v427 = vld [vmem:[%s5] sm:$0xff]
    %v428 = vld [vmem:[%s5 + $0x8] sm:$0xff]
    %v429 = vld [vmem:[%s5 + $0x10] sm:$0xff]
    %v430 = vld [vmem:[%s5 + $0x18] sm:$0x3f]
    %v431 = vld [vmem:[%s6] sm:$0x1]
    %v433 = vperm.slane %v431, 0
    %v436 = vsel %vm317, %v423, 0
    %v439 = vsel %vm317, %v424, 0
    %v442 = vsel %vm317, %v425, 0
    %v445 = vsel %vm317, %v426, 0
    %v448 = vsel %vm330, %v430, 0
    %450 = vmatpush.msra.mxu0 0.0
    %451 = vmatpush.msra.mxu0 0.0
    %452 = vmatpush.msra.mxu0 0.0
    %453 = vmatpush.msra.mxu0 0.0
    %454 = vmatpush.msra.mxu0 0.0
    %455 = vmatpush.msra.mxu0 0.0
    %456 = vmatpush.msra.mxu0 0.0
    %457 = vmatpush.msra.mxu0 0.0
    %458 = vmatpush.msra.mxu0 0.0
    %459 = vmatpush.msra.mxu0 0.0
    %460 = vmatpush.msra.mxu0 0.0
    %461 = vmatpush.msra.mxu0 0.0
    %462 = vmatpush.msra.mxu0 %v448
    %463 = vmatpush.msra.mxu0 %v429
    %464 = vmatpush.msra.mxu0 %v428
    %465 = vmatpush.msra.mxu0 %v427
    %466 = vmatmul.f32.gmra.mxu0 %v436
    %v467 = vpop.f32.mrf.mxu0
    %v468 = vadd.f32 %v433, %v467
    %469 = vmatmul.f32.gmra.mxu0 %v439
    %v470 = vpop.f32.mrf.mxu0
    %v471 = vadd.f32 %v433, %v470
    %472 = vmatmul.f32.gmra.mxu0 %v442
    %v473 = vpop.f32.mrf.mxu0
    %v474 = vadd.f32 %v433, %v473
    %475 = vmatmul.f32.gmra.mxu0 %v445
    %v476 = vpop.f32.mrf.mxu0
    %v477 = vadd.f32 %v433, %v476
    %478 = vdwg.mxu0
    %v479 = vmax.f32 %v468, 0.0
    %v480 = vmax.f32 %v471, 0.0
    %v481 = vmax.f32 %v474, 0.0
    %v482 = vmax.f32 %v477, 0.0
    %483 = vst.msk [vmem:[#allocation2 + $0x8] sm:$0xff] %vm108, %v479
    %484 = vst.msk [vmem:[#allocation2 + $0x10] sm:$0xff] %vm108, %v480
    %485 = vst.msk [vmem:[#allocation2 + $0x18] sm:$0xff] %vm108, %v481
    %486 = vst.msk [vmem:[#allocation2 + $0x20] sm:$0xff] %vm108, %v482
    %v487 = vld [vmem:[#allocation2 + $0x7] sm:$0xff]
    %v488 = vld [vmem:[#allocation2 + $0xf] sm:$0xff]
    %v489 = vld [vmem:[#allocation2 + $0x17] sm:$0xff]
    %v490 = vld [vmem:[#allocation2 + $0x1f] sm:$0xff]
    %v491 = vsel %vm244, %v487, 0.0
    %v492 = vsel %vm245, %v488, 0.0
    %v493 = vsel %vm246, %v489, 0.0
    %v494 = vsel %vm247, %v490, 0.0
    %v495 = vld [vmem:[#allocation2 + $0x9] sm:$0xff]
    %v496 = vld [vmem:[#allocation2 + $0x11] sm:$0xff]
    %v497 = vld [vmem:[#allocation2 + $0x19] sm:$0xff]
    %v498 = vld [vmem:[#allocation2 + $0x21] sm:$0xff]
    %v499 = vsel %vm260, %v495, 0.0
    %v500 = vsel %vm261, %v496, 0.0
    %v501 = vsel %vm262, %v497, 0.0
    %v502 = vsel %vm263, %v498, 0.0
    %507 = vrot.lane.b32.xlu0 %v479, 10
    %v508 = vpop.permute.xlu0 %507
    %509 = vrot.lane.b32.xlu0 %v480, 10
    %v510 = vpop.permute.xlu0 %509
    %511 = vrot.lane.b32.xlu0 %v481, 10
    %v512 = vpop.permute.xlu0 %511
    %513 = vrot.lane.b32.xlu0 %v482, 10
    %v514 = vpop.permute.xlu0 %513
    %523 = vrot.lane.b32.xlu0 %v499, 20
    %v524 = vpop.permute.xlu0 %523
    %525 = vrot.lane.b32.xlu0 %v500, 20
    %v526 = vpop.permute.xlu0 %525
    %527 = vrot.lane.b32.xlu0 %v501, 20
    %v528 = vpop.permute.xlu0 %527
    %529 = vrot.lane.b32.xlu0 %v502, 20
    %v530 = vpop.permute.xlu0 %529
    %v535 = vsel %vm108, %v491, %v508
    %v536 = vsel %vm108, %v492, %v510
    %v537 = vsel %vm108, %v493, %v512
    %v538 = vsel %vm108, %v494, %v514
    %v539 = vsel %vm304, %v535, %v524
    %v540 = vsel %vm304, %v536, %v526
    %v541 = vsel %vm304, %v537, %v528
    %v542 = vsel %vm304, %v538, %v530
    %v543 = vld [vmem:[%s7] sm:$0xff]
    %v544 = vld [vmem:[%s7 + $0x8] sm:$0xff]
    %v545 = vld [vmem:[%s7 + $0x10] sm:$0xff]
    %v546 = vld [vmem:[%s7 + $0x18] sm:$0x3f]
    %v547 = vld [vmem:[%s8] sm:$0x1]
    %v549 = vperm.slane %v547, 0
    %v552 = vsel %vm317, %v539, 0
    %v555 = vsel %vm317, %v540, 0
    %v558 = vsel %vm317, %v541, 0
    %v561 = vsel %vm317, %v542, 0
    %v564 = vsel %vm330, %v546, 0
    %566 = vmatpush.msra.mxu0 0.0
    %567 = vmatpush.msra.mxu0 0.0
    %568 = vmatpush.msra.mxu0 0.0
    %569 = vmatpush.msra.mxu0 0.0
    %570 = vmatpush.msra.mxu0 0.0
    %571 = vmatpush.msra.mxu0 0.0
    %572 = vmatpush.msra.mxu0 0.0
    %573 = vmatpush.msra.mxu0 0.0
    %574 = vmatpush.msra.mxu0 0.0
    %575 = vmatpush.msra.mxu0 0.0
    %576 = vmatpush.msra.mxu0 0.0
    %577 = vmatpush.msra.mxu0 0.0
    %578 = vmatpush.msra.mxu0 %v564
    %579 = vmatpush.msra.mxu0 %v545
    %580 = vmatpush.msra.mxu0 %v544
    %581 = vmatpush.msra.mxu0 %v543
    %582 = vmatmul.f32.gmra.mxu0 %v552
    %v583 = vpop.f32.mrf.mxu0
    %v584 = vadd.f32 %v549, %v583
    %585 = vmatmul.f32.gmra.mxu0 %v555
    %v586 = vpop.f32.mrf.mxu0
    %v587 = vadd.f32 %v549, %v586
    %588 = vmatmul.f32.gmra.mxu0 %v558
    %v589 = vpop.f32.mrf.mxu0
    %v590 = vadd.f32 %v549, %v589
    %591 = vmatmul.f32.gmra.mxu0 %v561
    %v592 = vpop.f32.mrf.mxu0
    %v593 = vadd.f32 %v549, %v592
    %594 = vdwg.mxu0
    %v595 = vmax.f32 %v584, 0.0
    %v596 = vmax.f32 %v587, 0.0
    %v597 = vmax.f32 %v590, 0.0
    %v598 = vmax.f32 %v593, 0.0
    %599 = vrot.lane.b32.xlu0 %v479, 20
    %v600 = vpop.permute.xlu0 %599
    %601 = vrot.lane.b32.xlu0 %v480, 20
    %v602 = vpop.permute.xlu0 %601
    %603 = vrot.lane.b32.xlu0 %v481, 20
    %v604 = vpop.permute.xlu0 %603
    %605 = vrot.lane.b32.xlu0 %v482, 20
    %v606 = vpop.permute.xlu0 %605
    %615 = vrot.lane.b32.xlu0 %v595, 30
    %v616 = vpop.permute.xlu0 %615
    %617 = vrot.lane.b32.xlu0 %v596, 30
    %v618 = vpop.permute.xlu0 %617
    %619 = vrot.lane.b32.xlu0 %v597, 30
    %v620 = vpop.permute.xlu0 %619
    %621 = vrot.lane.b32.xlu0 %v598, 30
    %v622 = vpop.permute.xlu0 %621
    %v627 = vsel %vm108, %v228, %v392
    %v628 = vsel %vm108, %v229, %v394
    %v629 = vsel %vm108, %v230, %v396
    %v630 = vsel %vm108, %v231, %v398
    %v631 = vsel %vm304, %v627, %v600
    %v632 = vsel %vm304, %v628, %v602
    %v633 = vsel %vm304, %v629, %v604
    %v634 = vsel %vm304, %v630, %v606
    %v635 = vsel %vm317, %v631, %v616
    %v636 = vsel %vm317, %v632, %v618
    %v637 = vsel %vm317, %v633, %v620
    %v638 = vsel %vm317, %v634, %v622
    %vm639 = vcmask 326656
    %640 = vst.msk [vmem:[%s13] sm:$0xff] %vm639, %v635
    %641 = vst.msk [vmem:[%s13 + $0x8] sm:$0xff] %vm639, %v636
    %642 = vst.msk [vmem:[%s13 + $0x10] sm:$0xff] %vm639, %v637
    %643 = vst.msk [vmem:[%s13 + $0x18] sm:$0xff] %vm639, %v638
    %644 = vst.msk [vmem:[#allocation2 + $0x8] sm:$0xff] %vm108, %v595
    %645 = vst.msk [vmem:[#allocation2 + $0x10] sm:$0xff] %vm108, %v596
    %646 = vst.msk [vmem:[#allocation2 + $0x18] sm:$0xff] %vm108, %v597
    %647 = vst.msk [vmem:[#allocation2 + $0x20] sm:$0xff] %vm108, %v598
    %s648 = scalar_lea.vmem [#allocation2], 8
    %v649 = vld [vmem:[%s648] ss:$16 sm:$0x3]
    %s650 = scalar_lea.vmem [#allocation2], 9
    %v651 = vld [vmem:[%s650] ss:$16 sm:$0x3]
    %s652 = scalar_lea.vmem [#allocation2], 10
    %v653 = vld [vmem:[%s652] ss:$16 sm:$0x3]
    %s654 = scalar_lea.vmem [#allocation2], 11
    %v655 = vld [vmem:[%s654] ss:$16 sm:$0x3]
    %s656 = scalar_lea.vmem [#allocation2], 12
    %v657 = vld [vmem:[%s656] ss:$16 sm:$0x3]
    %s658 = scalar_lea.vmem [#allocation2], 13
    %v659 = vld [vmem:[%s658] ss:$16 sm:$0x3]
    %s660 = scalar_lea.vmem [#allocation2], 14
    %v661 = vld [vmem:[%s660] ss:$16 sm:$0x3]
    %s662 = scalar_lea.vmem [#allocation2], 15
    %v663 = vld [vmem:[%s662] ss:$16 sm:$0x3]
    %s664 = scalar_lea.vmem [#allocation2], 16
    %v665 = vld [vmem:[%s664] ss:$16 sm:$0x3]
    %s666 = scalar_lea.vmem [#allocation2], 17
    %v667 = vld [vmem:[%s666] ss:$16 sm:$0x3]
    %s668 = scalar_lea.vmem [#allocation2], 18
    %v669 = vld [vmem:[%s668] ss:$16 sm:$0x3]
    %s670 = scalar_lea.vmem [#allocation2], 19
    %v671 = vld [vmem:[%s670] ss:$16 sm:$0x3]
    %s672 = scalar_lea.vmem [#allocation2], 20
    %v673 = vld [vmem:[%s672] ss:$16 sm:$0x3]
    %s674 = scalar_lea.vmem [#allocation2], 21
    %v675 = vld [vmem:[%s674] ss:$16 sm:$0x3]
    %s676 = scalar_lea.vmem [#allocation2], 22
    %v677 = vld [vmem:[%s676] ss:$16 sm:$0x3]
    %s678 = scalar_lea.vmem [#allocation2], 23
    %v679 = vld [vmem:[%s678] ss:$16 sm:$0x3]
    %681 = vrot.lane.b32.xlu0 %v651, 10
    %v682 = vpop.permute.xlu0 %681
    %685 = vrot.lane.b32.xlu0 %v653, 20
    %v686 = vpop.permute.xlu0 %685
    %689 = vrot.lane.b32.xlu0 %v655, 30
    %v690 = vpop.permute.xlu0 %689
    %693 = vrot.lane.b32.xlu0 %v657, 40
    %v694 = vpop.permute.xlu0 %693
    %697 = vrot.lane.b32.xlu0 %v659, 50
    %v698 = vpop.permute.xlu0 %697
    %701 = vrot.lane.b32.xlu0 %v661, 60
    %v702 = vpop.permute.xlu0 %701
    %705 = vrot.lane.b32.xlu0 %v663, 70
    %v706 = vpop.permute.xlu0 %705
    %709 = vrot.lane.b32.xlu0 %v665, 80
    %v710 = vpop.permute.xlu0 %709
    %713 = vrot.lane.b32.xlu0 %v667, 90
    %v714 = vpop.permute.xlu0 %713
    %717 = vrot.lane.b32.xlu0 %v669, 100
    %v718 = vpop.permute.xlu0 %717
    %721 = vrot.lane.b32.xlu0 %v671, 110
    %v722 = vpop.permute.xlu0 %721
    %725 = vrot.lane.b32.xlu0 %v673, 120
    %v726 = vpop.permute.xlu0 %725
    %729 = vrot.lane.b32.xlu0 %v675, 2
    %v730 = vpop.permute.xlu0 %729
    %733 = vrot.lane.b32.xlu0 %v677, 12
    %v734 = vpop.permute.xlu0 %733
    %737 = vrot.lane.b32.xlu0 %v679, 22
    %v738 = vpop.permute.xlu0 %737
    %v740 = vsel %vm108, %v649, %v682
    %v741 = vsel %vm304, %v740, %v686
    %v742 = vsel %vm317, %v741, %v690
    %v743 = vsel %vm639, %v742, %v694
    %vm744 = vcmask 408576
    %v745 = vsel %vm744, %v743, %v698
    %vm746 = vcmask 490496
    %v747 = vsel %vm746, %v745, %v702
    %vm748 = vcmask 572416
    %v749 = vsel %vm748, %v747, %v706
    %vm750 = vcmask 654336
    %v751 = vsel %vm750, %v749, %v710
    %vm752 = vcmask 736256
    %v753 = vsel %vm752, %v751, %v714
    %vm754 = vcmask 818176
    %v755 = vsel %vm754, %v753, %v718
    %vm756 = vcmask 900096
    %v757 = vsel %vm756, %v755, %v722
    %vm758 = vcmask 982016
    %v759 = vsel %vm758, %v757, %v726
    %v760 = vsel %vm172, %v726, %v730
    %vm761 = vcmask 97280
    %v762 = vsel %vm761, %v760, %v734
    %vm763 = vcmask 179200
    %v764 = vsel %vm763, %v762, %v738
    %v765 = vld [vmem:[%s9] sm:$0xff]
    %v766 = vld [vmem:[%s9 + $0x8] sm:$0xff]
    %v767 = vld [vmem:[%s9 + $0x10] sm:$0xff]
    %v768 = vld [vmem:[%s9 + $0x18] sm:$0xff]
    %v769 = vld [vmem:[%s9 + $0x20] sm:$0xff]
    %v770 = vld [vmem:[%s9 + $0x28] sm:$0xff]
    %v771 = vld [vmem:[%s9 + $0x30] sm:$0xff]
    %v772 = vld [vmem:[%s9 + $0x38] sm:$0xff]
    %v773 = vld [vmem:[%s9 + $0x40] sm:$0xff]
    %v774 = vld [vmem:[%s9 + $0x48] sm:$0xff]
    %v775 = vld [vmem:[%s9 + $0x50] sm:$0xff]
    %v776 = vld [vmem:[%s9 + $0x58] sm:$0xff]
    %v777 = vld [vmem:[%s9 + $0x60] sm:$0xff]
    %v778 = vld [vmem:[%s9 + $0x68] sm:$0xff]
    %v779 = vld [vmem:[%s9 + $0x70] sm:$0xff]
    %v780 = vld [vmem:[%s9 + $0x78] sm:$0xff]
    %v781 = vld [vmem:[%s9 + $0x80] sm:$0xff]
    %v782 = vld [vmem:[%s9 + $0x88] sm:$0xff]
    %v783 = vld [vmem:[%s9 + $0x90] sm:$0xff]
    %v784 = vld [vmem:[%s9 + $0x98] sm:$0xff]
    %v785 = vld [vmem:[%s10] sm:$0x1]
    %v787 = vperm.slane %v785, 0
    %vm789 = vcmask 261120
    %v791 = vsel %vm789, %v764, 0
    %793 = vmatpush.msra.mxu0 %v780
    %794 = vmatpush.msra.mxu0 %v779
    %795 = vmatpush.msra.mxu0 %v778
    %796 = vmatpush.msra.mxu0 %v777
    %797 = vmatpush.msra.mxu0 %v776
    %798 = vmatpush.msra.mxu0 %v775
    %799 = vmatpush.msra.mxu0 %v774
    %800 = vmatpush.msra.mxu0 %v773
    %801 = vmatpush.msra.mxu0 %v772
    %802 = vmatpush.msra.mxu0 %v771
    %803 = vmatpush.msra.mxu0 %v770
    %804 = vmatpush.msra.mxu0 %v769
    %805 = vmatpush.msra.mxu0 %v768
    %806 = vmatpush.msra.mxu0 %v767
    %807 = vmatpush.msra.mxu0 %v766
    %808 = vmatpush.msra.mxu0 %v765
    %809 = vmatmul.f32.gmra.mxu0 %v759
    %v810 = vpop.f32.mrf.mxu0
    %v811 = vadd.f32 %v787, %v810
    %812 = vdwg.mxu0
    %813 = vmatpush.msra.mxu0 0.0
    %814 = vmatpush.msra.mxu0 0.0
    %815 = vmatpush.msra.mxu0 0.0
    %816 = vmatpush.msra.mxu0 0.0
    %817 = vmatpush.msra.mxu0 0.0
    %818 = vmatpush.msra.mxu0 0.0
    %819 = vmatpush.msra.mxu0 0.0
    %820 = vmatpush.msra.mxu0 0.0
    %821 = vmatpush.msra.mxu0 0.0
    %822 = vmatpush.msra.mxu0 0.0
    %823 = vmatpush.msra.mxu0 0.0
    %824 = vmatpush.msra.mxu0 0.0
    %825 = vmatpush.msra.mxu0 %v784
    %826 = vmatpush.msra.mxu0 %v783
    %827 = vmatpush.msra.mxu0 %v782
    %828 = vmatpush.msra.mxu0 %v781
    %829 = vmatmul.f32.gmra.mxu0 %v791
    %v830 = vpop.f32.mrf.mxu0
    %v831 = vadd.f32 %v811, %v830
    %832 = vdwg.mxu0
    %v833 = vmax.f32 %v831, 0.0
    %v834 = vld [vmem:[%s11] sm:$0xff]
    %v835 = vld [vmem:[%s11 + $0x8] sm:$0xff]
    %v836 = vld [vmem:[%s11 + $0x10] sm:$0xff]
    %v837 = vld [vmem:[%s11 + $0x18] sm:$0xff]
    %v838 = vld [vmem:[%s11 + $0x20] sm:$0xff]
    %v839 = vld [vmem:[%s11 + $0x28] sm:$0xff]
    %v840 = vld [vmem:[%s11 + $0x30] sm:$0xff]
    %v841 = vld [vmem:[%s11 + $0x38] sm:$0xff]
    %v842 = vld [vmem:[%s11 + $0x40] sm:$0xff]
    %v843 = vld [vmem:[%s11 + $0x48] sm:$0xff]
    %v844 = vld [vmem:[%s11 + $0x50] sm:$0xff]
    %v845 = vld [vmem:[%s11 + $0x58] sm:$0xff]
    %v846 = vld [vmem:[%s11 + $0x60] sm:$0xff]
    %v847 = vld [vmem:[%s11 + $0x68] sm:$0xff]
    %v848 = vld [vmem:[%s11 + $0x70] sm:$0xff]
    %v849 = vld [vmem:[%s11 + $0x78] sm:$0xff]
    %v850 = vld [vmem:[%s12] sm:$0x1]
    %v852 = vperm.slane %v850, 0
    %854 = vmatpush.msra.mxu0 %v849
    %855 = vmatpush.msra.mxu0 %v848
    %856 = vmatpush.msra.mxu0 %v847
    %857 = vmatpush.msra.mxu0 %v846
    %858 = vmatpush.msra.mxu0 %v845
    %859 = vmatpush.msra.mxu0 %v844
    %860 = vmatpush.msra.mxu0 %v843
    %861 = vmatpush.msra.mxu0 %v842
    %862 = vmatpush.msra.mxu0 %v841
    %863 = vmatpush.msra.mxu0 %v840
    %864 = vmatpush.msra.mxu0 %v839
    %865 = vmatpush.msra.mxu0 %v838
    %866 = vmatpush.msra.mxu0 %v837
    %867 = vmatpush.msra.mxu0 %v836
    %868 = vmatpush.msra.mxu0 %v835
    %869 = vmatpush.msra.mxu0 %v834
    %870 = vmatmul.f32.gmra.mxu0 %v833
    %v871 = vpop.f32.mrf.mxu0
    %v872 = vadd.f32 %v852, %v871
    %873 = vdwg.mxu0
    %vm874 = vcmask 25600
    %875 = vst.msk [vmem:[#allocation3] sm:$0x3] %vm874, %v872
    // Predicated region
    $region54: #{cnn_forward.1} parent=1 // pred_check
      _
    $region55: #{cnn_forward.1} parent=1 // pred_check_branch
      %877 = sbr.rel (0) target = $region57
    $region56: #{cnn_forward.1} parent=1 // pred_region
      _
    $region57: #{cnn_forward.1} parent=1 // pred_fallthru
      _
    // Predicated region
    $region58: #{cnn_forward.1} parent=1 // pred_check
      _
    $region59: #{cnn_forward.1} parent=1 // pred_check_branch
      %879 = sbr.rel (0) target = $region61
    $region60: #{cnn_forward.1} parent=1 // pred_region
      %881 = vsyncadd [#allocation4], 0
      %s883 = sshll.u32 [#allocation3], 4
      %s884 = int_to_ptr.vmem [resolvable:$true] %s883
      %s885 = sshll.u32 %s14, 4
      %s886 = int_to_ptr.hbm [resolvable:$true] %s885
      %888 = dma.vmem_to_hbm [thread:$0]  %s884, 32, %s886, [#allocation4]
    $region61: #{cnn_forward.1} parent=1 // pred_fallthru
      _
    // Predicated region
    $region62: #{cnn_forward.1} parent=1 // pred_check
      _
    $region63: #{cnn_forward.1} parent=1 // pred_check_branch
      %890 = sbr.rel (0) target = $region65
    $region64: #{cnn_forward.1} parent=1 // pred_region
      _
    $region65: #{cnn_forward.1} parent=1 // pred_fallthru
      _
    // Predicated region
    $region66: #{cnn_forward.1} parent=1 // pred_check
      _
    $region67: #{cnn_forward.1} parent=1 // pred_check_branch
      %892 = sbr.rel (0) target = $region69
    $region68: #{cnn_forward.1} parent=1 // pred_region
      %894 = dma.done [#allocation4], 32
    $region69: #{cnn_forward.1} parent=1 // pred_fallthru
      _
    %895 = vsyncpa [#allocation4], 1

</llo_original>
